<compile_context>
chip_gen: v7x
topology: tpu7x:2x2x1
jax: 0.10.0
libtpu: 0.0.40
codegen_flags: <defaults>
</compile_context>

<pallas_src>
import math

import jax
import jax.numpy as jnp
from jax.experimental import pallas as pl
from jax.experimental.pallas import tpu as pltpu


def _conv_tile(x_ref, w_ref, row0, ho_tile, wo, c_in):
    """One output-row tile of the 3x3/stride-2 conv as a single MXU matmul.

    x_ref: (1, 4, ho_pad+1, wo+1, c_in) bf16 stride-2 phase planes (resident).
    w_ref: (9*c_in, c_out_pad) bf16 weights, K ordered (kh, kw, c_in).
    Returns (ho_tile*wo, c_out_pad) f32.
    """
    p_tile = ho_tile * wo
    parts = []
    for kh in range(3):
        for kw in range(3):
            phase = (kh & 1) * 2 + (kw & 1)
            sl = x_ref[0, phase,
                       pl.ds(row0 + kh // 2, ho_tile),
                       pl.ds(kw // 2, wo),
                       :]                              # (ho_tile, wo, c_in)
            parts.append(sl.reshape(p_tile, c_in))
    lhs = jnp.concatenate(parts, axis=-1)              # (p_tile, 9*c_in)
    return jnp.dot(lhs, w_ref[...], preferred_element_type=jnp.float32)


def _make_stats_kernel(ho_tile, wo, c_in, ho, ho_pad):
    p_tile = ho_tile * wo

    def kernel(x_ref, w_ref, sum_ref, sq_ref):
        p = pl.program_id(1)

        @pl.when(p == 0)
        def _init():
            sum_ref[...] = jnp.zeros_like(sum_ref)
            sq_ref[...] = jnp.zeros_like(sq_ref)

        acc = _conv_tile(x_ref, w_ref, p * ho_tile, ho_tile, wo, c_in)

        if ho_pad > ho:  # static: mask zero-padded tail output rows out of stats
            i = jax.lax.broadcasted_iota(jnp.int32, (p_tile, 1), 0)
            limit = (ho - p * ho_tile) * wo
            acc = jnp.where(i < limit, acc, 0.0)

        sum_ref[...] += jnp.sum(acc, axis=0, keepdims=True)[None]
        sq_ref[...] += jnp.sum(acc * acc, axis=0, keepdims=True)[None]

    return kernel


def _make_norm_kernel(ho_tile, wo, c_in):
    def kernel(x_ref, w_ref, scale_ref, out_ref):
        p = pl.program_id(1)
        acc = _conv_tile(x_ref, w_ref, p * ho_tile, ho_tile, wo, c_in)
        sc = scale_ref[0]                      # (2, c_out_pad) f32
        inv_std = sc[0:1, :]                   # (1, c_out_pad)
        shift = sc[1:2, :]                     # (1, c_out_pad)
        y = jnp.maximum(acc * inv_std - shift, 0.0)
        out_ref[...] = y[None].astype(out_ref.dtype)

    return kernel


def _vmem_limit_bytes():
    """Generation-aware VMEM budget (v7x: 64 MiB physical, v5e/v6e: 128 MiB)."""
    cap = None
    try:
        cap = int(getattr(pltpu.get_tpu_info(), "vmem_capacity_bytes"))
    except Exception:
        cap = None
    if not cap:
        try:
            kind = jax.devices()[0].device_kind.lower()
        except Exception:
            kind = ""
        cap = 64 * 1024 * 1024 if "v7" in kind else 128 * 1024 * 1024
    return max(32 * 1024 * 1024, int(cap * 0.8))


def down_forward(x_nchw, conv_w, conv_b=None, *, eps=1e-5, max_rows_per_tile=2048):
    """Down forward: Conv2d(3x3, stride 2, pad 1) + InstanceNorm2d + ReLU.

    x_nchw: (N, C_in, H, W) f32; conv_w: (C_out, C_in, 3, 3). conv_b is accepted
    for signature parity but unused: a per-channel bias is exactly cancelled by
    InstanceNorm2d(affine=False)'s per-channel mean subtraction.
    """
    del conv_b  # mathematically dead under InstanceNorm(affine=False)

    n, c_in, h, w = x_nchw.shape
    c_out = conv_w.shape[0]
    ho, wo = (h + 1) // 2, (w + 1) // 2
    count = float(ho * wo)

    # Lane-dense channel padding; fill the 256-wide MXU on v6e/v7x when large.
    if c_out <= 128:
        c_out_pad = 128
    else:
        c_out_pad = ((c_out + 255) // 256) * 256

    # cdiv row tiling; keep p_tile = ho_tile*wo a multiple of 8 sublanes.
    g = 8 // math.gcd(wo, 8)
    desired = max(1, max_rows_per_tile // max(wo, 1))
    ho_tile = max(g, (desired // g) * g)
    ho_tile = min(ho_tile, ((ho + g - 1) // g) * g)
    n_ptiles = -(-ho // ho_tile)
    ho_pad = n_ptiles * ho_tile
    p_tile = ho_tile * wo

    # --- Wrapper prep: one fused pad + reshape + transpose (1 read + 1 write).
    # phases[b, 2*pr+pc, i, j, c] = padded_input[b, 2*i+pr, 2*j+pc, c]
    x_nhwc = jnp.transpose(x_nchw, (0, 2, 3, 1)).astype(jnp.bfloat16)
    hp, wp = 2 * (ho_pad + 1), 2 * (wo + 1)
    xp = jnp.pad(x_nhwc, ((0, 0), (1, hp - h - 1), (1, wp - w - 1), (0, 0)))
    xp = xp.reshape(n, ho_pad + 1, 2, wo + 1, 2, c_in)
    phases = jnp.transpose(xp, (0, 2, 4, 1, 3, 5)).reshape(
        n, 4, ho_pad + 1, wo + 1, c_in)
    # TODO(synk): for very small c_in the channels-last planes lane-pad to 128 in
    # VMEM; a (ho, (wo+1)*c_in) merged-minor layout would shrink that footprint.

    # Weights: (C_out, C_in, 3, 3) -> (9*c_in, c_out_pad), K ordered (kh, kw, c).
    w_k = jnp.transpose(conv_w, (2, 3, 1, 0)).reshape(9 * c_in, c_out)
    w_k = jnp.pad(w_k, ((0, 0), (0, c_out_pad - c_out))).astype(jnp.bfloat16)

    phase_spec = pl.BlockSpec((1, 4, ho_pad + 1, wo + 1, c_in),
                              lambda b, p: (b, 0, 0, 0, 0))
    w_spec = pl.BlockSpec((9 * c_in, c_out_pad), lambda b, p: (0, 0))
    stat_spec = pl.BlockSpec((1, 1, c_out_pad), lambda b, p: (b, 0, 0))

    vmem_limit = _vmem_limit_bytes()

    # ---- Pass 1: per-(batch, channel) sum and sum-of-squares of the conv.
    s, sq = pl.pallas_call(
        _make_stats_kernel(ho_tile, wo, c_in, ho, ho_pad),
        out_shape=(jax.ShapeDtypeStruct((n, 1, c_out_pad), jnp.float32),
                   jax.ShapeDtypeStruct((n, 1, c_out_pad), jnp.float32)),
        grid_spec=pltpu.PrefetchScalarGridSpec(
            num_scalar_prefetch=0,
            grid=(n, n_ptiles),
            in_specs=[phase_spec, w_spec],
            out_specs=[stat_spec, stat_spec]),
        compiler_params=pltpu.CompilerParams(
            dimension_semantics=("parallel", "arbitrary"),
            vmem_limit_bytes=vmem_limit),
    )(phases, w_k)

    # Tiny per-channel InstanceNorm parameters (computed once between passes).
    mean = s / count
    var = jnp.maximum(sq / count - mean * mean, 0.0)   # clamp: cancellation safety
    inv_std = jax.lax.rsqrt(var + eps)
    shift = mean * inv_std
    scale = jnp.concatenate([inv_std, shift], axis=1)  # (n, 2, c_out_pad) f32

    scale_spec = pl.BlockSpec((1, 2, c_out_pad), lambda b, p: (b, 0, 0))
    out_spec = pl.BlockSpec((1, p_tile, c_out_pad), lambda b, p: (b, p, 0))

    # ---- Pass 2: recompute conv tile, normalize + ReLU, tiled writeback.
    y = pl.pallas_call(
        _make_norm_kernel(ho_tile, wo, c_in),
        out_shape=jax.ShapeDtypeStruct((n, ho_pad * wo, c_out_pad), jnp.float32),
        grid_spec=pltpu.PrefetchScalarGridSpec(
            num_scalar_prefetch=0,
            grid=(n, n_ptiles),
            in_specs=[phase_spec, w_spec, scale_spec],
            out_specs=out_spec),
        compiler_params=pltpu.CompilerParams(
            dimension_semantics=("parallel", "parallel"),
            vmem_limit_bytes=vmem_limit),
    )(phases, w_k, scale)

    y = y.reshape(n, ho_pad, wo, c_out_pad)[:, :ho, :, :c_out]
    return jnp.transpose(y, (0, 3, 1, 2)).astype(x_nchw.dtype)   # back to NCHW


def _down_reference(x, w, b, eps=1e-5):
    """Pure-JAX f32 reference: conv + bias + InstanceNorm(affine=False) + ReLU."""
    y = jax.lax.conv_general_dilated(
        x, w, window_strides=(2, 2), padding=((1, 1), (1, 1)),
        dimension_numbers=("NCHW", "OIHW", "NCHW"))
    y = y + b.reshape(1, -1, 1, 1)
    mean = y.mean(axis=(2, 3), keepdims=True)
    var = ((y - mean) ** 2).mean(axis=(2, 3), keepdims=True)
    y = (y - mean) * jax.lax.rsqrt(var + eps)
    return jnp.maximum(y, 0.0)


if __name__ == "__main__":
    key = jax.random.PRNGKey(0)
    k_x, k_w, k_b = jax.random.split(key, 3)

    N, C_IN, H, W = 2, 4, 16, 16
    C_OUT = 8

    x = jax.random.normal(k_x, (N, C_IN, H, W), dtype=jnp.float32)
    fan_in = C_IN * 3 * 3
    bound = 1.0 / (fan_in ** 0.5)
    conv_w = jax.random.uniform(k_w, (C_OUT, C_IN, 3, 3),
                                minval=-bound, maxval=bound, dtype=jnp.float32)
    conv_b = jax.random.uniform(k_b, (C_OUT,),
                                minval=-bound, maxval=bound, dtype=jnp.float32)

    # Small row cap so the tiny test exercises multi-tile stats accumulation AND
    # the zero-padded / masked tail path (ho=8 -> ho_tile=3 -> 3 tiles, ho_pad=9).
    y = down_forward(x, conv_w, conv_b, max_rows_per_tile=24)
    jax.block_until_ready(y)
    assert y.shape == (N, C_OUT, H // 2, W // 2), y.shape

    # Correctness vs. f32 XLA reference (kernel uses bf16 inputs -> loose tol).
    y_ref = _down_reference(x, conv_w, conv_b)
    err = float(jnp.max(jnp.abs(y - y_ref)))
    assert err < 0.2, f"max abs error {err}"
    print("KERNEL_OK")
</pallas_src>

<mosaic_0001>
module attributes {stable_mosaic.version = 11 : i64} {
  func.func @kernel(%arg0: i32, %arg1: i32, %arg2: memref<1x4x10x9x4xbf16, #tpu.memory_space<vmem>>, %arg3: memref<36x128xbf16, #tpu.memory_space<vmem>>, %arg4: memref<1x1x128xf32, #tpu.memory_space<vmem>>, %arg5: memref<1x1x128xf32, #tpu.memory_space<vmem>>) attributes {dimension_semantics = [#tpu.dimension_semantics<parallel>, #tpu.dimension_semantics<arbitrary>], iteration_bounds = array<i64: 2, 3>, scalar_prefetch = 0 : i64, scratch_operands = 0 : i64, tpu.core_type = #tpu.core_type<tc>, window_params = [{transform_indices = @transform_0, window_bounds = array<i64: 1, 4, 10, 9, 4>}, {pipeline_mode = #tpu.pipeline_mode<synchronous>, transform_indices = @transform_1, window_bounds = array<i64: 36, 128>}, {transform_indices = @transform_2, window_bounds = array<i64: 1, 1, 128>}, {transform_indices = @transform_3, window_bounds = array<i64: 1, 1, 128>}]} {
    %c0_i32 = arith.constant 0 : i32
    %0 = arith.cmpi eq, %arg1, %c0_i32 : i32
    %1 = arith.extui %0 : i1 to i32
    %c0_i32_0 = arith.constant 0 : i32
    %2 = arith.cmpi ne, %1, %c0_i32_0 : i32
    scf.if %2 {
      %cst_60 = arith.constant 0.000000e+00 : f32
      %75 = vector.broadcast %cst_60 : f32 to vector<1x1x128xf32>
      %c0_61 = arith.constant 0 : index
      %c0_62 = arith.constant 0 : index
      %c0_63 = arith.constant 0 : index
      %76 = vector.load %arg4[%c0_61, %c0_62, %c0_63] : memref<1x1x128xf32, #tpu.memory_space<vmem>>, vector<1x1x128xf32>
      tpu.vector_store %arg4[%c0_61, %c0_62, %c0_63], %75 {strides = array<i32>} : memref<1x1x128xf32, #tpu.memory_space<vmem>>, vector<1x1x128xf32>,
      %cst_64 = arith.constant 0.000000e+00 : f32
      %77 = vector.broadcast %cst_64 : f32 to vector<1x1x128xf32>
      %c0_65 = arith.constant 0 : index
      %c0_66 = arith.constant 0 : index
      %c0_67 = arith.constant 0 : index
      %78 = vector.load %arg5[%c0_65, %c0_66, %c0_67] : memref<1x1x128xf32, #tpu.memory_space<vmem>>, vector<1x1x128xf32>
      tpu.vector_store %arg5[%c0_65, %c0_66, %c0_67], %77 {strides = array<i32>} : memref<1x1x128xf32, #tpu.memory_space<vmem>>, vector<1x1x128xf32>,
    } else {
    }
    %c3_i32 = arith.constant 3 : i32
    %3 = arith.muli %arg1, %c3_i32 : i32
    %c0_i32_1 = arith.constant 0 : i32
    %4 = arith.addi %3, %c0_i32_1 : i32
    %c0 = arith.constant 0 : index
    %c0_2 = arith.constant 0 : index
    %5 = arith.index_cast %4 : i32 to index
    %c0_3 = arith.constant 0 : index
    %c0_4 = arith.constant 0 : index
    %6 = vector.load %arg2[%c0, %c0_2, %5, %c0_3, %c0_4] : memref<1x4x10x9x4xbf16, #tpu.memory_space<vmem>>, vector<1x1x3x8x4xbf16>
    %7 = vector.shape_cast %6 : vector<1x1x3x8x4xbf16> to vector<3x8x4xbf16>
    %8 = vector.shape_cast %7 : vector<3x8x4xbf16> to vector<24x4xbf16>
    %c0_i32_5 = arith.constant 0 : i32
    %9 = arith.addi %3, %c0_i32_5 : i32
    %c0_6 = arith.constant 0 : index
    %c1 = arith.constant 1 : index
    %10 = arith.index_cast %9 : i32 to index
    %c0_7 = arith.constant 0 : index
    %c0_8 = arith.constant 0 : index
    %11 = vector.load %arg2[%c0_6, %c1, %10, %c0_7, %c0_8] : memref<1x4x10x9x4xbf16, #tpu.memory_space<vmem>>, vector<1x1x3x8x4xbf16>
    %12 = vector.shape_cast %11 : vector<1x1x3x8x4xbf16> to vector<3x8x4xbf16>
    %13 = vector.shape_cast %12 : vector<3x8x4xbf16> to vector<24x4xbf16>
    %c0_i32_9 = arith.constant 0 : i32
    %14 = arith.addi %3, %c0_i32_9 : i32
    %c0_10 = arith.constant 0 : index
    %c0_11 = arith.constant 0 : index
    %15 = arith.index_cast %14 : i32 to index
    %c1_12 = arith.constant 1 : index
    %c0_13 = arith.constant 0 : index
    %16 = vector.load %arg2[%c0_10, %c0_11, %15, %c1_12, %c0_13] : memref<1x4x10x9x4xbf16, #tpu.memory_space<vmem>>, vector<1x1x3x8x4xbf16>
    %17 = vector.shape_cast %16 : vector<1x1x3x8x4xbf16> to vector<3x8x4xbf16>
    %18 = vector.shape_cast %17 : vector<3x8x4xbf16> to vector<24x4xbf16>
    %c0_i32_14 = arith.constant 0 : i32
    %19 = arith.addi %3, %c0_i32_14 : i32
    %c0_15 = arith.constant 0 : index
    %c2 = arith.constant 2 : index
    %20 = arith.index_cast %19 : i32 to index
    %c0_16 = arith.constant 0 : index
    %c0_17 = arith.constant 0 : index
    %21 = vector.load %arg2[%c0_15, %c2, %20, %c0_16, %c0_17] : memref<1x4x10x9x4xbf16, #tpu.memory_space<vmem>>, vector<1x1x3x8x4xbf16>
    %22 = vector.shape_cast %21 : vector<1x1x3x8x4xbf16> to vector<3x8x4xbf16>
    %23 = vector.shape_cast %22 : vector<3x8x4xbf16> to vector<24x4xbf16>
    %c0_i32_18 = arith.constant 0 : i32
    %24 = arith.addi %3, %c0_i32_18 : i32
    %c0_19 = arith.constant 0 : index
    %c3 = arith.constant 3 : index
    %25 = arith.index_cast %24 : i32 to index
    %c0_20 = arith.constant 0 : index
    %c0_21 = arith.constant 0 : index
    %26 = vector.load %arg2[%c0_19, %c3, %25, %c0_20, %c0_21] : memref<1x4x10x9x4xbf16, #tpu.memory_space<vmem>>, vector<1x1x3x8x4xbf16>
    %27 = vector.shape_cast %26 : vector<1x1x3x8x4xbf16> to vector<3x8x4xbf16>
    %28 = vector.shape_cast %27 : vector<3x8x4xbf16> to vector<24x4xbf16>
    %c0_i32_22 = arith.constant 0 : i32
    %29 = arith.addi %3, %c0_i32_22 : i32
    %c0_23 = arith.constant 0 : index
    %c2_24 = arith.constant 2 : index
    %30 = arith.index_cast %29 : i32 to index
    %c1_25 = arith.constant 1 : index
    %c0_26 = arith.constant 0 : index
    %31 = vector.load %arg2[%c0_23, %c2_24, %30, %c1_25, %c0_26] : memref<1x4x10x9x4xbf16, #tpu.memory_space<vmem>>, vector<1x1x3x8x4xbf16>
    %32 = vector.shape_cast %31 : vector<1x1x3x8x4xbf16> to vector<3x8x4xbf16>
    %33 = vector.shape_cast %32 : vector<3x8x4xbf16> to vector<24x4xbf16>
    %c1_i32 = arith.constant 1 : i32
    %34 = arith.addi %3, %c1_i32 : i32
    %c0_27 = arith.constant 0 : index
    %c0_28 = arith.constant 0 : index
    %35 = arith.index_cast %34 : i32 to index
    %c0_29 = arith.constant 0 : index
    %c0_30 = arith.constant 0 : index
    %36 = vector.load %arg2[%c0_27, %c0_28, %35, %c0_29, %c0_30] : memref<1x4x10x9x4xbf16, #tpu.memory_space<vmem>>, vector<1x1x3x8x4xbf16>
    %37 = vector.shape_cast %36 : vector<1x1x3x8x4xbf16> to vector<3x8x4xbf16>
    %38 = vector.shape_cast %37 : vector<3x8x4xbf16> to vector<24x4xbf16>
    %c1_i32_31 = arith.constant 1 : i32
    %39 = arith.addi %3, %c1_i32_31 : i32
    %c0_32 = arith.constant 0 : index
    %c1_33 = arith.constant 1 : index
    %40 = arith.index_cast %39 : i32 to index
    %c0_34 = arith.constant 0 : index
    %c0_35 = arith.constant 0 : index
    %41 = vector.load %arg2[%c0_32, %c1_33, %40, %c0_34, %c0_35] : memref<1x4x10x9x4xbf16, #tpu.memory_space<vmem>>, vector<1x1x3x8x4xbf16>
    %42 = vector.shape_cast %41 : vector<1x1x3x8x4xbf16> to vector<3x8x4xbf16>
    %43 = vector.shape_cast %42 : vector<3x8x4xbf16> to vector<24x4xbf16>
    %c1_i32_36 = arith.constant 1 : i32
    %44 = arith.addi %3, %c1_i32_36 : i32
    %c0_37 = arith.constant 0 : index
    %c0_38 = arith.constant 0 : index
    %45 = arith.index_cast %44 : i32 to index
    %c1_39 = arith.constant 1 : index
    %c0_40 = arith.constant 0 : index
    %46 = vector.load %arg2[%c0_37, %c0_38, %45, %c1_39, %c0_40] : memref<1x4x10x9x4xbf16, #tpu.memory_space<vmem>>, vector<1x1x3x8x4xbf16>
    %47 = vector.shape_cast %46 : vector<1x1x3x8x4xbf16> to vector<3x8x4xbf16>
    %48 = vector.shape_cast %47 : vector<3x8x4xbf16> to vector<24x4xbf16>
    %49 = tpu.concatenate %8, %13, %18, %23, %28, %33, %38, %43, %48 in 1 : vector<24x4xbf16>, vector<24x4xbf16>, vector<24x4xbf16>, vector<24x4xbf16>, vector<24x4xbf16>, vector<24x4xbf16>, vector<24x4xbf16>, vector<24x4xbf16>, vector<24x4xbf16> -> vector<24x36xbf16>
    %c0_41 = arith.constant 0 : index
    %c0_42 = arith.constant 0 : index
    %50 = vector.load %arg3[%c0_41, %c0_42] : memref<36x128xbf16, #tpu.memory_space<vmem>>, vector<36x128xbf16>
    %cst = arith.constant dense<0.000000e+00> : vector<24x128xf32>
    %51 = tpu.matmul %49, %50, %cst {dimension_numbers = #tpu.dot_dimension_numbers<[1], [0], [0], [1], [0, 0, 1, 1], [], []>} : vector<24x36xbf16>, vector<36x128xbf16>, vector<24x128xf32> -> vector<24x128xf32>
    %52 = tpu.iota {dimensions = array<i32: 0>} : vector<24x1xi32>
    %c3_i32_43 = arith.constant 3 : i32
    %53 = arith.muli %arg1, %c3_i32_43 : i32
    %c8_i32 = arith.constant 8 : i32
    %54 = arith.subi %c8_i32, %53 : i32
    %c8_i32_44 = arith.constant 8 : i32
    %55 = arith.muli %54, %c8_i32_44 : i32
    %56 = vector.broadcast %55 : i32 to vector<24x1xi32>
    %57 = arith.cmpi slt, %52, %56 : vector<24x1xi32>
    %cst_45 = arith.constant 0.000000e+00 : f32
    %58 = vector.shape_cast %57 : vector<24x1xi1> to vector<24x1xi1>
    %59 = vector.broadcast %58 : vector<24x1xi1> to vector<24x128xi1>
    %60 = vector.broadcast %cst_45 : f32 to vector<24x128xf32>
    %61 = arith.select %59, %51, %60 : vector<24x128xi1>, vector<24x128xf32>
    %c0_46 = arith.constant 0 : index
    %c0_47 = arith.constant 0 : index
    %c0_48 = arith.constant 0 : index
    %62 = vector.load %arg4[%c0_46, %c0_47, %c0_48] : memref<1x1x128xf32, #tpu.memory_space<vmem>>, vector<1x1x128xf32>
    %cst_49 = arith.constant dense<0.000000e+00> : vector<128xf32>
    %63 = vector.multi_reduction <add>, %61, %cst_49 [0] : vector<24x128xf32> to vector<128xf32>
    %64 = vector.shape_cast %63 : vector<128xf32> to vector<1x128xf32>
    %65 = vector.shape_cast %64 : vector<1x128xf32> to vector<1x1x128xf32>
    %66 = arith.addf %62, %65 : vector<1x1x128xf32>
    %c0_50 = arith.constant 0 : index
    %c0_51 = arith.constant 0 : index
    %c0_52 = arith.constant 0 : index
    %67 = vector.load %arg4[%c0_50, %c0_51, %c0_52] : memref<1x1x128xf32, #tpu.memory_space<vmem>>, vector<1x1x128xf32>
    tpu.vector_store %arg4[%c0_50, %c0_51, %c0_52], %66 {strides = array<i32>} : memref<1x1x128xf32, #tpu.memory_space<vmem>>, vector<1x1x128xf32>,
    %c0_53 = arith.constant 0 : index
    %c0_54 = arith.constant 0 : index
    %c0_55 = arith.constant 0 : index
    %68 = vector.load %arg5[%c0_53, %c0_54, %c0_55] : memref<1x1x128xf32, #tpu.memory_space<vmem>>, vector<1x1x128xf32>
    %69 = arith.mulf %61, %61 : vector<24x128xf32>
    %cst_56 = arith.constant dense<0.000000e+00> : vector<128xf32>
    %70 = vector.multi_reduction <add>, %69, %cst_56 [0] : vector<24x128xf32> to vector<128xf32>
    %71 = vector.shape_cast %70 : vector<128xf32> to vector<1x128xf32>
    %72 = vector.shape_cast %71 : vector<1x128xf32> to vector<1x1x128xf32>
    %73 = arith.addf %68, %72 : vector<1x1x128xf32>
    %c0_57 = arith.constant 0 : index
    %c0_58 = arith.constant 0 : index
    %c0_59 = arith.constant 0 : index
    %74 = vector.load %arg5[%c0_57, %c0_58, %c0_59] : memref<1x1x128xf32, #tpu.memory_space<vmem>>, vector<1x1x128xf32>
    tpu.vector_store %arg5[%c0_57, %c0_58, %c0_59], %73 {strides = array<i32>} : memref<1x1x128xf32, #tpu.memory_space<vmem>>, vector<1x1x128xf32>,
    return
  }
  func.func @transform_0(%arg0: i32, %arg1: i32) -> (i32, i32, i32, i32, i32) {
    %c0_i32 = arith.constant 0 : i32
    %c0_i32_0 = arith.constant 0 : i32
    %c0_i32_1 = arith.constant 0 : i32
    %c0_i32_2 = arith.constant 0 : i32
    %c0_i32_3 = arith.constant 0 : i32
    return %arg0, %c0_i32, %c0_i32_0, %c0_i32_1, %c0_i32_2 : i32, i32, i32, i32, i32
  }
  func.func @transform_1(%arg0: i32, %arg1: i32) -> (i32, i32) {
    %c0_i32 = arith.constant 0 : i32
    %c0_i32_0 = arith.constant 0 : i32
    %c0_i32_1 = arith.constant 0 : i32
    return %c0_i32, %c0_i32_0 : i32, i32
  }
  func.func @transform_2(%arg0: i32, %arg1: i32) -> (i32, i32, i32) {
    %c0_i32 = arith.constant 0 : i32
    %c0_i32_0 = arith.constant 0 : i32
    %c0_i32_1 = arith.constant 0 : i32
    return %arg0, %c0_i32, %c0_i32_0 : i32, i32, i32
  }
  func.func @transform_3(%arg0: i32, %arg1: i32) -> (i32, i32, i32) {
    %c0_i32 = arith.constant 0 : i32
    %c0_i32_0 = arith.constant 0 : i32
    %c0_i32_1 = arith.constant 0 : i32
    return %arg0, %c0_i32, %c0_i32_0 : i32, i32, i32
  }
}

</mosaic_0001>

<llo_original>
// kernel: tpu_custom_call.1
$region0: #{tpu_custom_call.1}
  #allocation0 [shape = 'u32[]', space=smem, size = 0x4, offset = 0x4, fixed_abs, tag = 'smem constant byte address 0x4 - core index']
  #allocation1 [shape = 'u32[144,128]{1,0:T(1,128)}', space=vmem, size = 0x12000, scoped, tag = 'internal scratch']
  %s0 = inlined_call_operand.hbm [shape: bf16[2,4,10,9,4], index: 0, kind: input, shape index: {}]
  %s1 = inlined_call_operand.hbm [shape: bf16[36,128], index: 1, kind: input, shape index: {}]
  %s2 = inlined_call_operand.hbm [shape: f32[2,1,128], index: 2, kind: output, shape index: {0}]
  %s3 = inlined_call_operand.hbm [shape: f32[2,1,128], index: 3, kind: output, shape index: {1}]
  %4 = xla_tuple %s2, %s3
  %s5 = sld [smem:[#allocation0]]
  $region61: #{tpu_custom_call.1} parent=0
    _
  %s7 = ssub.s32 1, %s5
  %s8 = scalar_select 0, %s7, %s5
  $region1: #{tpu_custom_call.1} parent=0
    #allocation2 [shape = 'u8[327680]{0}', space=vmem, size = 0x50000, scoped, tag = 'input window, operand 0']
    #allocation3 [shape = 's32[2]{0}', space=sflag, size = 0x8, scoped, tag = 'scoped memory for tpu_custom_call.1']
    #allocation4 [shape = 's32[2]{0}', space=sflag, size = 0x8, scoped, tag = 'scoped memory for tpu_custom_call.1']
    #allocation5 [shape = 'u8[10240]{0}', space=vmem, size = 0x2800, scoped, tag = 'input window, operand 1, single buffered']
    #allocation6 [shape = 's32[1]{0}', space=sflag, size = 0x4, scoped, tag = 'scoped memory for tpu_custom_call.1']
    #allocation7 [shape = 'u8[1024]{0}', space=vmem, size = 0x400, scoped, tag = 'output window, operand 0']
    #allocation8 [shape = 'u8[1024]{0}', space=vmem, size = 0x400, scoped, tag = 'output window, operand 1']
    #allocation9 [shape = 's32[2]{0}', space=sflag, size = 0x8, scoped, tag = 'scoped memory for tpu_custom_call.1']
    %9 = vsyncpa [#allocation3], 0
    %s10 = scalar_lea.sflag [#allocation3], 1
    %11 = vsyncpa %s10, 0
    %12 = vsyncpa [#allocation6], 0
    %13 = vsyncpa [#allocation4], 0
    %s14 = scalar_lea.sflag [#allocation4], 1
    %15 = vsyncpa %s14, 0
    %16 = vsyncpa [#allocation9], 0
    %s17 = scalar_lea.sflag [#allocation9], 1
    %18 = vsyncpa %s17, 0
    loop: start=0, step=1, limit=8
    $region2: #{tpu_custom_call.1} parent=1 // loop_pre_header
      _
    $region3: #{tpu_custom_call.1} parent=1 // loop_header
      %s20 = sphi 0, %s24
      %p21 = scmp.ge.s32.totalorder %s20, 8
      %s27 = sphi 0, %s39
      %s28 = sphi 0, %s35
      %s29 = sphi 0, %s27
      %s30 = sphi 0, %s28
      %s31 = sphi 0, %s29
      %s32 = sphi 0, %s30
      %s42 = sphi 0, %s44
      %s45 = sphi 0, %s42
      %s46 = sphi 0, %s45
      %s62 = sphi 0, %s46
      %s66 = sphi 0, %s66
      %s68 = sphi 0, %s66
      %s69 = sphi 0, %s68
      %s83 = sphi 0, %s69
      %s89 = sphi 0, %s91
      %s92 = sphi 0, %s89
      %s93 = sphi 0, %s92
      %s109 = sphi 0, %s93
      %s115 = sphi 0, %s117
      %s118 = sphi 0, %s115
      %s119 = sphi 0, %s118
      %s135 = sphi 0, %s119
    $region4: #{tpu_custom_call.1} parent=1 // loop_header_branch
      %23 = sbr.rel (%p21) target = $region8
    $region5: #{tpu_custom_call.1} parent=1 // loop_body
      %s25 = ssub.s32 %s20, 1
      %s26 = ssub.s32 %s20, 2
      %s33 = sadd.s32 1, %s28
      %p34 = scmp.ge.s32.totalorder %s33, 3
      %s35 = scalar_select %p34, 0, %s33
      %s36 = sadd.s32 1, %s27
      %s37 = scalar_select %p34, %s36, %s27
      %p38 = scmp.ge.s32.totalorder %s37, 2
      %s39 = scalar_select %p38, 0, %s37
      %s40 = ssub.s32 %s27, %s39
      %p41 = scmp.eq.s32.totalorder %s40, 0
      %s43 = sadd.s32 %s42, 1
      %s44 = scalar_select %p41, %s42, %s43
      %p47 = pneg %p41
      %p48 = scmp.eq.s32.totalorder %s20, 5
      %p49 = por %p47, %p48
      %p50 = scmp.ne.s32.totalorder %s42, %s45
      %p51 = scmp.eq.s32.totalorder %s20, 0
      %p52 = por %p50, %p51
      %p53 = scmp.ne.s32.totalorder %s42, %s45
      %p54 = scmp.eq.s32.totalorder %s25, 5
      %p55 = por %p53, %p54
      %p56 = scmp.ne.s32.totalorder %s45, %s46
      %p57 = scmp.eq.s32.totalorder %s25, 0
      %p58 = por %p56, %p57
      %p59 = scmp.ne.s32.totalorder %s45, %s46
      %p60 = scmp.eq.s32.totalorder %s26, 5
      %p61 = por %p59, %p60
      %p63 = scmp.ne.s32.totalorder %s46, %s62
      %p64 = scmp.eq.s32.totalorder %s26, 0
      %p65 = por %p63, %p64
      %s67 = sadd.s32 %s66, 1
      %p70 = scmp.eq.s32.totalorder %s20, 5
      %p71 = scmp.ne.s32.totalorder %s66, %s68
      %p72 = scmp.eq.s32.totalorder %s20, 0
      %p73 = por %p71, %p72
      %p74 = scmp.ne.s32.totalorder %s66, %s68
      %p75 = scmp.eq.s32.totalorder %s25, 5
      %p76 = por %p74, %p75
      %p77 = scmp.ne.s32.totalorder %s68, %s69
      %p78 = scmp.eq.s32.totalorder %s25, 0
      %p79 = por %p77, %p78
      %p80 = scmp.ne.s32.totalorder %s68, %s69
      %p81 = scmp.eq.s32.totalorder %s26, 5
      %p82 = por %p80, %p81
      %p84 = scmp.ne.s32.totalorder %s69, %s83
      %p85 = scmp.eq.s32.totalorder %s26, 0
      %p86 = por %p84, %p85
      %s87 = ssub.s32 %s27, %s39
      %p88 = scmp.eq.s32.totalorder %s87, 0
      %s90 = sadd.s32 %s89, 1
      %s91 = scalar_select %p88, %s89, %s90
      %p94 = pneg %p88
      %p95 = scmp.eq.s32.totalorder %s20, 5
      %p96 = por %p94, %p95
      %p97 = scmp.ne.s32.totalorder %s89, %s92
      %p98 = scmp.eq.s32.totalorder %s20, 0
      %p99 = por %p97, %p98
      %p100 = scmp.ne.s32.totalorder %s89, %s92
      %p101 = scmp.eq.s32.totalorder %s25, 5
      %p102 = por %p100, %p101
      %p103 = scmp.ne.s32.totalorder %s92, %s93
      %p104 = scmp.eq.s32.totalorder %s25, 0
      %p105 = por %p103, %p104
      %p106 = scmp.ne.s32.totalorder %s92, %s93
      %p107 = scmp.eq.s32.totalorder %s26, 5
      %p108 = por %p106, %p107
      %p110 = scmp.ne.s32.totalorder %s93, %s109
      %p111 = scmp.eq.s32.totalorder %s26, 0
      %p112 = por %p110, %p111
      %s113 = ssub.s32 %s27, %s39
      %p114 = scmp.eq.s32.totalorder %s113, 0
      %s116 = sadd.s32 %s115, 1
      %s117 = scalar_select %p114, %s115, %s116
      %p120 = pneg %p114
      %p121 = scmp.eq.s32.totalorder %s20, 5
      %p122 = por %p120, %p121
      %p123 = scmp.ne.s32.totalorder %s115, %s118
      %p124 = scmp.eq.s32.totalorder %s20, 0
      %p125 = por %p123, %p124
      %p126 = scmp.ne.s32.totalorder %s115, %s118
      %p127 = scmp.eq.s32.totalorder %s25, 5
      %p128 = por %p126, %p127
      %p129 = scmp.ne.s32.totalorder %s118, %s119
      %p130 = scmp.eq.s32.totalorder %s25, 0
      %p131 = por %p129, %p130
      %p132 = scmp.ne.s32.totalorder %s118, %s119
      %p133 = scmp.eq.s32.totalorder %s26, 5
      %p134 = por %p132, %p133
      %p136 = scmp.ne.s32.totalorder %s119, %s135
      %p137 = scmp.eq.s32.totalorder %s26, 0
      %p138 = por %p136, %p137
      %p139 = scmp.le.s32.totalorder 1, %s20
      %p140 = scmp.lt.s32.totalorder %s20, 7
      %p141 = pnand %p139, %p140
      %p142 = pneg %p141
      // Predicated region
      $region9: #{tpu_custom_call.1} parent=5 // pred_check
        _
      $region10: #{tpu_custom_call.1} parent=5 // pred_check_branch
        %144 = sbr.rel (%p141) target = $region12
      $region11: #{tpu_custom_call.1} parent=5 // pred_region
        %s145 = ssub.s32 %s20, 1
        // Predicated region
        $region13: #{tpu_custom_call.1} parent=11 // pred_check
          %p146 = pneg %p79
        $region14: #{tpu_custom_call.1} parent=11 // pred_check_branch
          %148 = sbr.rel (%p146) target = $region16
        $region15: #{tpu_custom_call.1} parent=11 // pred_region
          %s150 = ssub.s32 320, 320
          %151 = vsyncadd [#allocation6], %s150
          %s152 = sshll.u32 [#allocation5], 4
          %s153 = int_to_ptr.vmem [resolvable:$true] %s152
          %158 = dma.hbm_to_vmem [thread:$0]  %s1, 320, %s153, [#allocation6], 64, 64, 4
        $region16: #{tpu_custom_call.1} parent=11 // pred_fallthru
          _
      $region12: #{tpu_custom_call.1} parent=5 // pred_fallthru
        _
      %p159 = scmp.lt.s32.totalorder %s20, 6
      // Predicated region
      $region17: #{tpu_custom_call.1} parent=5 // pred_check
        %p160 = pneg %p159
      $region18: #{tpu_custom_call.1} parent=5 // pred_check_branch
        %162 = sbr.rel (%p160) target = $region20
      $region19: #{tpu_custom_call.1} parent=5 // pred_region
        // Predicated region
        $region21: #{tpu_custom_call.1} parent=19 // pred_check
          %p163 = pneg %p52
        $region22: #{tpu_custom_call.1} parent=19 // pred_check_branch
          %165 = sbr.rel (%p163) target = $region24
        $region23: #{tpu_custom_call.1} parent=19 // pred_region
          %s166 = sand.u32 %s42, 1
          %s167 = scalar_lea.sflag [#allocation3], %s166
          %s168 = sand.u32 %s42, 1
          %s169 = smul.addr %s168, 320
          %s170 = scalar_lea.vmem [#allocation2], %s169
          %s172 = ssub.s32 5120, 5120
          %173 = vsyncadd %s167, %s172
          %s174 = smul.addr %s27, 80
          %s175 = smul.addr %s174, 64
          %s176 = scalar_lea.hbm %s0, %s175
          %s177 = sshll.u32 %s170, 4
          %s178 = int_to_ptr.vmem [resolvable:$true] %s177
          %183 = dma.hbm_to_vmem [thread:$0]  %s176, 5120, %s178, %s167, 64, 64, 4
        $region24: #{tpu_custom_call.1} parent=19 // pred_fallthru
          _
      $region20: #{tpu_custom_call.1} parent=5 // pred_fallthru
        _
      %p184 = scmp.le.s32.totalorder 1, %s20
      %p185 = scmp.lt.s32.totalorder %s20, 7
      %p186 = pnand %p184, %p185
      %p187 = pneg %p186
      // Predicated region
      $region25: #{tpu_custom_call.1} parent=5 // pred_check
        _
      $region26: #{tpu_custom_call.1} parent=5 // pred_check_branch
        %189 = sbr.rel (%p186) target = $region28
      $region27: #{tpu_custom_call.1} parent=5 // pred_region
        %s190 = ssub.s32 %s20, 1
        %s191 = sand.u32 %s45, 1
        %s192 = scalar_lea.sflag [#allocation3], %s191
        %s193 = sand.u32 %s45, 1
        %s194 = smul.addr %s193, 320
        %s195 = scalar_lea.vmem [#allocation2], %s194
        // Predicated region
        $region29: #{tpu_custom_call.1} parent=27 // pred_check
          %p196 = pneg %p58
        $region30: #{tpu_custom_call.1} parent=27 // pred_check_branch
          %198 = sbr.rel (%p196) target = $region32
        $region31: #{tpu_custom_call.1} parent=27 // pred_region
          %199 = dma.done %s192, 5120
        $region32: #{tpu_custom_call.1} parent=27 // pred_fallthru
          _
        // Predicated region
        $region33: #{tpu_custom_call.1} parent=27 // pred_check
          %p200 = pneg %p79
        $region34: #{tpu_custom_call.1} parent=27 // pred_check_branch
          %202 = sbr.rel (%p200) target = $region36
        $region35: #{tpu_custom_call.1} parent=27 // pred_region
          %203 = dma.done [#allocation6], 320
        $region36: #{tpu_custom_call.1} parent=27 // pred_fallthru
          _
        %s204 = sand.u32 %s45, 1
        %s205 = scalar_lea.sflag [#allocation3], %s204
        %s206 = sand.u32 %s45, 1
        %s207 = smul.addr %s206, 320
        %s208 = scalar_lea.vmem [#allocation2], %s207
        %p209 = pneg %p58
        %p210 = pneg %p55
        %p211 = pneg %p79
        %p212 = pneg %p76
        %p213 = pneg %p105
        %p214 = pneg %p102
        %s215 = sand.u32 %s92, 1
        %s216 = scalar_lea.sflag [#allocation4], %s215
        %s217 = sand.u32 %s92, 1
        %s218 = scalar_lea.vmem [#allocation7], %s217
        %p219 = pneg %p131
        %p220 = pneg %p128
        %s221 = sand.u32 %s118, 1
        %s222 = scalar_lea.sflag [#allocation9], %s221
        %s223 = sand.u32 %s118, 1
        %s224 = scalar_lea.vmem [#allocation8], %s223
        %p226 = scmp.eq.s32.totalorder %s30, 0
        // Predicated region
        $region37: #{tpu_custom_call.1} parent=27 // pred_check
          %p227 = pneg %p226
        $region38: #{tpu_custom_call.1} parent=27 // pred_check_branch
          %229 = sbr.rel (%p227) target = $region40
        $region39: #{tpu_custom_call.1} parent=27 // pred_region
          %230 = vst [vmem:[%s218] sm:$0x1] 0.0
          %231 = vst [vmem:[%s224] sm:$0x1] 0.0
        $region40: #{tpu_custom_call.1} parent=27 // pred_fallthru
          _
        %s232 = smul.u32 %s30, 3
        %s233 = smul.u32 %s232, 2
        %s234 = smul.addr %s233, 4
        %s235 = scalar_lea.vmem %s195, %s234 [#allocation2]
        %v236 = vld [vmem:[%s235] sm:$0xf]
        %v237 = vld [vmem:[%s235 + $0x8] sm:$0xf]
        %v238 = vld [vmem:[%s235 + $0x10] sm:$0xf]
        %s239 = sadd.s32 %s233, 20
        %s240 = smul.addr %s239, 4
        %s241 = scalar_lea.vmem %s195, %s240 [#allocation2]
        %v242 = vld [vmem:[%s241] sm:$0xf]
        %v243 = vld [vmem:[%s241 + $0x8] sm:$0xf]
        %v244 = vld [vmem:[%s241 + $0x10] sm:$0xf]
        %v245 = vld [vmem:[%s235 + $0x4] sm:$0x1]
        %v246 = vld [vmem:[%s235 + $0xc] sm:$0x1]
        %v247 = vld [vmem:[%s235 + $0x14] sm:$0x1]
        %vm248 = vsmask.f32 3328
        %vm249 = vsmask.f32 7440
        %vm250 = vmor %vm248, %vm249
        %v252 = vshrl.u32 %v236, 16
        %v254 = vrot.slane %v252, 4
        %v255 = vshll.u32 %v236, 16
        %v257 = vrot.slane %v255, 5
        %v258 = vor.u32 %v254, %v257
        %v259 = vrot.slane %v258, 4
        %v261 = vshll.u32 %v245, 16
        %v263 = vrot.slane %v261, 5
        %v264 = vsel %vm250, %v259, %v263
        %v266 = vshrl.u32 %v237, 16
        %v268 = vrot.slane %v266, 4
        %v269 = vshll.u32 %v237, 16
        %v271 = vrot.slane %v269, 5
        %v272 = vor.u32 %v268, %v271
        %v273 = vrot.slane %v272, 4
        %v275 = vshll.u32 %v246, 16
        %v277 = vrot.slane %v275, 5
        %v278 = vsel %vm250, %v273, %v277
        %v280 = vshrl.u32 %v238, 16
        %v282 = vrot.slane %v280, 4
        %v283 = vshll.u32 %v238, 16
        %v285 = vrot.slane %v283, 5
        %v286 = vor.u32 %v282, %v285
        %v287 = vrot.slane %v286, 4
        %v289 = vshll.u32 %v247, 16
        %v291 = vrot.slane %v289, 5
        %v292 = vsel %vm250, %v287, %v291
        %s293 = sadd.s32 %s233, 40
        %s294 = smul.addr %s293, 4
        %s295 = scalar_lea.vmem %s195, %s294 [#allocation2]
        %v296 = vld [vmem:[%s295] sm:$0xf]
        %v297 = vld [vmem:[%s295 + $0x8] sm:$0xf]
        %v298 = vld [vmem:[%s295 + $0x10] sm:$0xf]
        %s299 = sadd.s32 %s233, 60
        %s300 = smul.addr %s299, 4
        %s301 = scalar_lea.vmem %s195, %s300 [#allocation2]
        %v302 = vld [vmem:[%s301] sm:$0xf]
        %v303 = vld [vmem:[%s301 + $0x8] sm:$0xf]
        %v304 = vld [vmem:[%s301 + $0x10] sm:$0xf]
        %v305 = vld [vmem:[%s295 + $0x4] sm:$0x1]
        %v306 = vld [vmem:[%s295 + $0xc] sm:$0x1]
        %v307 = vld [vmem:[%s295 + $0x14] sm:$0x1]
        %v309 = vshrl.u32 %v296, 16
        %v311 = vrot.slane %v309, 4
        %v312 = vshll.u32 %v296, 16
        %v314 = vrot.slane %v312, 5
        %v315 = vor.u32 %v311, %v314
        %v316 = vrot.slane %v315, 4
        %v318 = vshll.u32 %v305, 16
        %v320 = vrot.slane %v318, 5
        %v321 = vsel %vm250, %v316, %v320
        %v323 = vshrl.u32 %v297, 16
        %v325 = vrot.slane %v323, 4
        %v326 = vshll.u32 %v297, 16
        %v328 = vrot.slane %v326, 5
        %v329 = vor.u32 %v325, %v328
        %v330 = vrot.slane %v329, 4
        %v332 = vshll.u32 %v306, 16
        %v334 = vrot.slane %v332, 5
        %v335 = vsel %vm250, %v330, %v334
        %v337 = vshrl.u32 %v298, 16
        %v339 = vrot.slane %v337, 4
        %v340 = vshll.u32 %v298, 16
        %v342 = vrot.slane %v340, 5
        %v343 = vor.u32 %v339, %v342
        %v344 = vrot.slane %v343, 4
        %v346 = vshll.u32 %v307, 16
        %v348 = vrot.slane %v346, 5
        %v349 = vsel %vm250, %v344, %v348
        %s350 = sadd.s32 %s232, 1
        %s351 = smul.u32 %s350, 2
        %s352 = smul.addr %s351, 4
        %s353 = scalar_lea.vmem %s195, %s352 [#allocation2]
        %v354 = vld [vmem:[%s353] sm:$0xf]
        %v355 = vld [vmem:[%s353 + $0x8] sm:$0xf]
        %v356 = vld [vmem:[%s353 + $0x10] sm:$0xf]
        %s357 = sadd.s32 %s351, 20
        %s358 = smul.addr %s357, 4
        %s359 = scalar_lea.vmem %s195, %s358 [#allocation2]
        %v360 = vld [vmem:[%s359] sm:$0xf]
        %v361 = vld [vmem:[%s359 + $0x8] sm:$0xf]
        %v362 = vld [vmem:[%s359 + $0x10] sm:$0xf]
        %v363 = vld [vmem:[%s353 + $0x4] sm:$0x1]
        %v364 = vld [vmem:[%s353 + $0xc] sm:$0x1]
        %v365 = vld [vmem:[%s353 + $0x14] sm:$0x1]
        %v367 = vshrl.u32 %v354, 16
        %v369 = vrot.slane %v367, 4
        %v370 = vshll.u32 %v354, 16
        %v372 = vrot.slane %v370, 5
        %v373 = vor.u32 %v369, %v372
        %v374 = vrot.slane %v373, 4
        %v376 = vshll.u32 %v363, 16
        %v378 = vrot.slane %v376, 5
        %v379 = vsel %vm250, %v374, %v378
        %v381 = vshrl.u32 %v355, 16
        %v383 = vrot.slane %v381, 4
        %v384 = vshll.u32 %v355, 16
        %v386 = vrot.slane %v384, 5
        %v387 = vor.u32 %v383, %v386
        %v388 = vrot.slane %v387, 4
        %v390 = vshll.u32 %v364, 16
        %v392 = vrot.slane %v390, 5
        %v393 = vsel %vm250, %v388, %v392
        %v395 = vshrl.u32 %v356, 16
        %v397 = vrot.slane %v395, 4
        %v398 = vshll.u32 %v356, 16
        %v400 = vrot.slane %v398, 5
        %v401 = vor.u32 %v397, %v400
        %v402 = vrot.slane %v401, 4
        %v404 = vshll.u32 %v365, 16
        %v406 = vrot.slane %v404, 5
        %v407 = vsel %vm250, %v402, %v406
        %v411 = vunpack.c.l.b16 %v236
        %v412 = vunpack.c.l.b16 %v237
        %v413 = vunpack.c.l.b16 %v238
        %v414 = vpack.c.b16 %v412, %v411
        %v415 = vpack.c.b16 %v413, %v413
        %v419 = vunpack.c.l.b16 %v242
        %v420 = vunpack.c.l.b16 %v243
        %v421 = vunpack.c.l.b16 %v244
        %v422 = vpack.c.b16 %v420, %v419
        %v423 = vpack.c.b16 %v421, %v421
        %424 = vrot.lane.b32.xlu0 %v422, 4
        %v425 = vpop.permute.xlu0 %424
        %426 = vrot.lane.b32.xlu0 %v423, 4
        %v427 = vpop.permute.xlu0 %426
        %v428 = vunpack.c.l.b16 %v264
        %v429 = vunpack.c.l.b16 %v278
        %v430 = vunpack.c.l.b16 %v292
        %v431 = vpack.c.b16 %v429, %v428
        %v432 = vpack.c.b16 %v430, %v430
        %433 = vrot.lane.b32.xlu0 %v431, 8
        %v434 = vpop.permute.xlu0 %433
        %435 = vrot.lane.b32.xlu0 %v432, 8
        %v436 = vpop.permute.xlu0 %435
        %v440 = vunpack.c.l.b16 %v296
        %v441 = vunpack.c.l.b16 %v297
        %v442 = vunpack.c.l.b16 %v298
        %v443 = vpack.c.b16 %v441, %v440
        %v444 = vpack.c.b16 %v442, %v442
        %445 = vrot.lane.b32.xlu0 %v443, 12
        %v446 = vpop.permute.xlu0 %445
        %447 = vrot.lane.b32.xlu0 %v444, 12
        %v448 = vpop.permute.xlu0 %447
        %v452 = vunpack.c.l.b16 %v302
        %v453 = vunpack.c.l.b16 %v303
        %v454 = vunpack.c.l.b16 %v304
        %v455 = vpack.c.b16 %v453, %v452
        %v456 = vpack.c.b16 %v454, %v454
        %457 = vrot.lane.b32.xlu0 %v455, 16
        %v458 = vpop.permute.xlu0 %457
        %459 = vrot.lane.b32.xlu0 %v456, 16
        %v460 = vpop.permute.xlu0 %459
        %v461 = vunpack.c.l.b16 %v321
        %v462 = vunpack.c.l.b16 %v335
        %v463 = vunpack.c.l.b16 %v349
        %v464 = vpack.c.b16 %v462, %v461
        %v465 = vpack.c.b16 %v463, %v463
        %466 = vrot.lane.b32.xlu0 %v464, 20
        %v467 = vpop.permute.xlu0 %466
        %468 = vrot.lane.b32.xlu0 %v465, 20
        %v469 = vpop.permute.xlu0 %468
        %v473 = vunpack.c.l.b16 %v354
        %v474 = vunpack.c.l.b16 %v355
        %v475 = vunpack.c.l.b16 %v356
        %v476 = vpack.c.b16 %v474, %v473
        %v477 = vpack.c.b16 %v475, %v475
        %478 = vrot.lane.b32.xlu0 %v476, 24
        %v479 = vpop.permute.xlu0 %478
        %480 = vrot.lane.b32.xlu0 %v477, 24
        %v481 = vpop.permute.xlu0 %480
        %v485 = vunpack.c.l.b16 %v360
        %v486 = vunpack.c.l.b16 %v361
        %v487 = vunpack.c.l.b16 %v362
        %v488 = vpack.c.b16 %v486, %v485
        %v489 = vpack.c.b16 %v487, %v487
        %490 = vrot.lane.b32.xlu0 %v488, 28
        %v491 = vpop.permute.xlu0 %490
        %492 = vrot.lane.b32.xlu0 %v489, 28
        %v493 = vpop.permute.xlu0 %492
        %v494 = vunpack.c.l.b16 %v379
        %v495 = vunpack.c.l.b16 %v393
        %v496 = vunpack.c.l.b16 %v407
        %v497 = vpack.c.b16 %v495, %v494
        %v498 = vpack.c.b16 %v496, %v496
        %499 = vrot.lane.b32.xlu0 %v497, 32
        %v500 = vpop.permute.xlu0 %499
        %501 = vrot.lane.b32.xlu0 %v498, 32
        %v502 = vpop.permute.xlu0 %501
        %vm503 = vcmask 31744
        %v506 = vsel %vm503, %v414, %v425
        %v509 = vsel %vm503, %v415, %v427
        %vm510 = vcmask 64512
        %v512 = vsel %vm510, %v506, %v434
        %v514 = vsel %vm510, %v509, %v436
        %vm515 = vcmask 97280
        %v517 = vsel %vm515, %v512, %v446
        %v519 = vsel %vm515, %v514, %v448
        %vm520 = vcmask 130048
        %v522 = vsel %vm520, %v517, %v458
        %v524 = vsel %vm520, %v519, %v460
        %vm525 = vcmask 162816
        %v527 = vsel %vm525, %v522, %v467
        %v529 = vsel %vm525, %v524, %v469
        %vm530 = vcmask 195584
        %v532 = vsel %vm530, %v527, %v479
        %v534 = vsel %vm530, %v529, %v481
        %vm535 = vcmask 228352
        %v537 = vsel %vm535, %v532, %v491
        %v539 = vsel %vm535, %v534, %v493
        %vm540 = vcmask 261120
        %v542 = vsel %vm540, %v537, %v500
        %v544 = vsel %vm540, %v539, %v502
        %v545 = vld [vmem:[#allocation5] sm:$0xf]
        %v546 = vld [vmem:[#allocation5 + $0x4] sm:$0xf]
        %v547 = vld [vmem:[#allocation5 + $0x8] sm:$0xf]
        %v548 = vld [vmem:[#allocation5 + $0xc] sm:$0xf]
        %v549 = vld [vmem:[#allocation5 + $0x10] sm:$0x3]
        %v555 = vunpack.c.l.b16 %v545
        %v556 = vunpack.c.l.b16 %v546
        %v557 = vunpack.c.l.b16 %v547
        %v558 = vunpack.c.l.b16 %v548
        %v559 = vunpack.c.l.b16 %v549
        %v560 = vpack.c.b16 %v556, %v555
        %v561 = vpack.c.b16 %v558, %v557
        %v562 = vpack.c.b16 %v559, %v559
        %vm565 = vcmask 293888
        %v566 = vsel %vm565, %v542, 0
        %v568 = vsel %vm565, %v544, 0
        %vm570 = vcmask 1041408
        %v572 = vsel %vm570, %v562, 0
        %574 = vmatprep.subr.bf16.mxu0 0
        %575 = vmatpush1.bf16.msra.mxu0 %v560
        %576 = vmatprep.subr.bf16.mxu0 0
        %577 = vmatpush1.bf16.msra.mxu0 %v561
        %578 = vmatprep.subr.bf16.mxu0 0
        %579 = vmatpush1.bf16.msra.mxu0 %v572
        %580 = vmatprep.subr.bf16.mxu0 0
        %581 = vmatpush1.bf16.msra.mxu0 0
        %582 = vmatprep.subr.bf16.mxu0 0
        %583 = vmatpush1.bf16.msra.mxu0 0
        %584 = vmatprep.subr.bf16.mxu0 0
        %585 = vmatpush1.bf16.msra.mxu0 0
        %586 = vmatprep.subr.bf16.mxu0 0
        %587 = vmatpush1.bf16.msra.mxu0 0
        %588 = vmatprep.subr.bf16.mxu0 0
        %589 = vmatpush1.bf16.msra.mxu0 0
        %590 = vmatprep.subr.bf16.mxu0 0
        %591 = vmatpush1.bf16.msra.mxu0 0
        %592 = vmatprep.subr.bf16.mxu0 0
        %593 = vmatpush1.bf16.msra.mxu0 0
        %594 = vmatprep.subr.bf16.mxu0 0
        %595 = vmatpush1.bf16.msra.mxu0 0
        %596 = vmatprep.subr.bf16.mxu0 0
        %597 = vmatpush1.bf16.msra.mxu0 0
        %598 = vmatprep.subr.bf16.mxu0 0
        %599 = vmatpush1.bf16.msra.mxu0 0
        %600 = vmatprep.subr.bf16.mxu0 0
        %601 = vmatpush1.bf16.msra.mxu0 0
        %602 = vmatprep.subr.bf16.mxu0 0
        %603 = vmatpush1.bf16.msra.mxu0 0
        %604 = vmatprep.subr.bf16.mxu0 0
        %605 = vmatpush1.bf16.msra.mxu0 0
        %606 = vmatprep.mubr.bf16.mxu0 0
        %607 = vmatmul.mubr.bf16.gmra.mrb[0].mxu0 %v566
        %v608 = vpop.f32.mrb[0].mxu0
        %v609 = vadd.f32 0.0, %v608
        %v610 = vpop.f32.mrb[0].mxu0
        %v611 = vpop.f32.mrb[0].mxu0
        %v612 = vadd.f32 0.0, %v611
        %v613 = vpop.f32.mrb[0].mxu0
        %614 = vmatprep.mubr.bf16.mxu0 0
        %615 = vmatmul.mubr.bf16.gmra.mrb[0].mxu0 %v568
        %v616 = vpop.f32.mrb[0].mxu0
        %v617 = vadd.f32 0.0, %v616
        %v618 = vpop.f32.mrb[0].mxu0
        %v619 = vpop.f32.mrb[0].mxu0
        %v620 = vpop.f32.mrb[0].mxu0
        %621 = vdwg.mxu0
        %v622 = vlaneseq
        %v623 = vshrl.u32 %v622, 7
        %v624 = vadd.s32 %v623, 8
        %v625 = vadd.s32 %v623, 16
        %s626 = ssub.s32 8, %s232
        %s627 = smul.u32 %s626, 8
        %v628 = vstv %s627
        %vm629 = vcmp.lt.s32.totalorder %v623, %v628
        %vm630 = vcmp.lt.s32.totalorder %v624, %v628
        %vm631 = vcmp.lt.s32.totalorder %v625, %v628
        %v632 = vsel %vm629, 1, 0
        %v633 = vsel %vm630, 1, 0
        %v634 = vsel %vm631, 1, 0
        %vm635 = vcmp.eq.s32.totalorder %v632, 1
        %vm636 = vcmp.eq.s32.totalorder %v633, 1
        %vm637 = vcmp.eq.s32.totalorder %v634, 1
        %v638 = vsel %vm635, %v609, 0.0
        %v639 = vsel %vm636, %v612, 0.0
        %v640 = vsel %vm637, %v617, 0.0
        %v641 = vld [vmem:[%s218] sm:$0x1]
        %v642 = vadd.f32 %v638, %v639
        %v643 = vadd.f32 %v642, %v640
        %v644 = vrot.slane %v643, 4
        %v645 = vadd.f32 %v643, %v644
        %v646 = vrot.slane %v645, 2
        %v647 = vadd.f32 %v645, %v646
        %v648 = vrot.slane %v647, 1
        %v649 = vadd.f32 %v647, %v648
        %v650 = vadd.f32 %v641, %v649
        %651 = vst [vmem:[%s218] sm:$0x1] %v650
        %v652 = vld [vmem:[%s224] sm:$0x1]
        %v653 = vmul.f32 %v638, %v638
        %v654 = vmul.f32 %v639, %v639
        %v655 = vmul.f32 %v640, %v640
        %v656 = vadd.f32 %v653, %v654
        %v657 = vadd.f32 %v656, %v655
        %v658 = vrot.slane %v657, 4
        %v659 = vadd.f32 %v657, %v658
        %v660 = vrot.slane %v659, 2
        %v661 = vadd.f32 %v659, %v660
        %v662 = vrot.slane %v661, 1
        %v663 = vadd.f32 %v661, %v662
        %v664 = vadd.f32 %v652, %v663
        %665 = vst [vmem:[%s224] sm:$0x1] %v664
        %s666 = sand.u32 %s92, 1
        %s667 = scalar_lea.sflag [#allocation4], %s666
        %s668 = sand.u32 %s92, 1
        %s669 = scalar_lea.vmem [#allocation7], %s668
        %s670 = sand.u32 %s118, 1
        %s671 = scalar_lea.sflag [#allocation9], %s670
        %s672 = sand.u32 %s118, 1
        %s673 = scalar_lea.vmem [#allocation8], %s672
        // Predicated region
        $region41: #{tpu_custom_call.1} parent=27 // pred_check
          %p674 = pneg %p102
        $region42: #{tpu_custom_call.1} parent=27 // pred_check_branch
          %676 = sbr.rel (%p674) target = $region44
        $region43: #{tpu_custom_call.1} parent=27 // pred_region
          %s678 = ssub.s32 16, 16
          %679 = vsyncadd %s667, %s678
          %s680 = smul.addr %s29, 16
          %s681 = scalar_lea.hbm %s2, %s680
          %s683 = sshll.u32 %s669, 4
          %s684 = int_to_ptr.vmem [resolvable:$true] %s683
          %686 = dma.vmem_to_hbm [thread:$0]  %s684, 16, %s681, %s667
        $region44: #{tpu_custom_call.1} parent=27 // pred_fallthru
          _
        // Predicated region
        $region45: #{tpu_custom_call.1} parent=27 // pred_check
          %p687 = pneg %p128
        $region46: #{tpu_custom_call.1} parent=27 // pred_check_branch
          %689 = sbr.rel (%p687) target = $region48
        $region47: #{tpu_custom_call.1} parent=27 // pred_region
          %s691 = ssub.s32 16, 16
          %692 = vsyncadd %s671, %s691
          %s693 = smul.addr %s29, 16
          %s694 = scalar_lea.hbm %s3, %s693
          %s696 = sshll.u32 %s673, 4
          %s697 = int_to_ptr.vmem [resolvable:$true] %s696
          %699 = dma.vmem_to_hbm [thread:$0]  %s697, 16, %s694, %s671
        $region48: #{tpu_custom_call.1} parent=27 // pred_fallthru
          _
      $region28: #{tpu_custom_call.1} parent=5 // pred_fallthru
        _
      %p700 = scmp.le.s32.totalorder 2, %s20
      // Predicated region
      $region49: #{tpu_custom_call.1} parent=5 // pred_check
        %p701 = pneg %p700
      $region50: #{tpu_custom_call.1} parent=5 // pred_check_branch
        %703 = sbr.rel (%p701) target = $region52
      $region51: #{tpu_custom_call.1} parent=5 // pred_region
        %s704 = ssub.s32 %s20, 2
        // Predicated region
        $region53: #{tpu_custom_call.1} parent=51 // pred_check
          %p705 = pneg %p108
        $region54: #{tpu_custom_call.1} parent=51 // pred_check_branch
          %707 = sbr.rel (%p705) target = $region56
        $region55: #{tpu_custom_call.1} parent=51 // pred_region
          %s708 = sand.u32 %s93, 1
          %s709 = scalar_lea.sflag [#allocation4], %s708
          %s710 = sand.u32 %s93, 1
          %s711 = scalar_lea.vmem [#allocation7], %s710
          %712 = dma.done %s709, 16
        $region56: #{tpu_custom_call.1} parent=51 // pred_fallthru
          _
        // Predicated region
        $region57: #{tpu_custom_call.1} parent=51 // pred_check
          %p713 = pneg %p134
        $region58: #{tpu_custom_call.1} parent=51 // pred_check_branch
          %715 = sbr.rel (%p713) target = $region60
        $region59: #{tpu_custom_call.1} parent=51 // pred_region
          %s716 = sand.u32 %s119, 1
          %s717 = scalar_lea.sflag [#allocation9], %s716
          %s718 = sand.u32 %s119, 1
          %s719 = scalar_lea.vmem [#allocation8], %s718
          %720 = dma.done %s717, 16
        $region60: #{tpu_custom_call.1} parent=51 // pred_fallthru
          _
      $region52: #{tpu_custom_call.1} parent=5 // pred_fallthru
        _
    $region6: #{tpu_custom_call.1} parent=1 // loop_footer
      %s24 = sadd.s32 1, %s20
    $region7: #{tpu_custom_call.1} parent=1 // loop_footer_branch
      %19 = sbr.rel target = $region3
    $region8: #{tpu_custom_call.1} parent=1 // loop_exit
      _
    %721 = vsyncpa [#allocation3], 1
    %s722 = scalar_lea.sflag [#allocation3], 1
    %723 = vsyncpa %s722, 1
    %724 = vsyncpa [#allocation6], 1
    %725 = vsyncpa [#allocation4], 1
    %s726 = scalar_lea.sflag [#allocation4], 1
    %727 = vsyncpa %s726, 1
    %728 = vsyncpa [#allocation9], 1
    %s729 = scalar_lea.sflag [#allocation9], 1
    %730 = vsyncpa %s729, 1

</llo_original>
